<compile_context>
chip_gen: v7x
topology: tpu7x:2x2x1
jax: 0.10.0
libtpu: 0.0.40
codegen_flags: <defaults>
</compile_context>

<pallas_src>
import math

import jax
import jax.numpy as jnp
from jax.experimental import pallas as pl
from jax.experimental.pallas import tpu as pltpu


_LEAKY_SLOPE = 0.2
_BN_EPS = 1e-5
_VMEM_LIMIT = 32 * 1024 * 1024    # safe scoped-VMEM request on v5e/v6e/v7x
_TILE_BUDGET = 20 * 1024 * 1024   # double-buffered per-step working set cap
_TM_MAX = 512                     # target tile rows (512-1024 range from review)


def _round_up(a, b):
    return (a + b - 1) // b * b


def _im2col_nhwc(x, k, stride, pad):
    """NHWC x -> (N*Ho*Wo, k*k*C) patches; per-row ordering is (kh, kw, C)."""
    N, H, W, C = x.shape
    xp = jnp.pad(x, ((0, 0), (pad, pad), (pad, pad), (0, 0)))
    Ho = (H + 2 * pad - k) // stride + 1
    Wo = (W + 2 * pad - k) // stride + 1
    patches = []
    for i in range(k):
        for j in range(k):
            patches.append(xp[:, i:i + stride * Ho:stride, j:j + stride * Wo:stride, :])
    col = jnp.stack(patches, axis=3)                   # (N, Ho, Wo, k*k, C)
    return col.reshape(N * Ho * Wo, k * k * C), Ho, Wo


def _choose_tm(M, K, coutp):
    """Largest M-tile (multiple of 16 for bf16 sublanes) fitting the VMEM budget."""
    tm = min(_TM_MAX, _round_up(M, 16))

    def need(t):
        return (2 * t * K * 2          # cols tile (bf16), double-buffered
                + 2 * K * coutp * 2    # weight block (bf16), double-buffered
                + 2 * t * coutp * 4    # f32 output tile, double-buffered
                + 4 * coutp * 4)       # per-tile stats

    while tm > 16 and need(tm) > _TILE_BUDGET:
        tm = max(16, _round_up(tm // 2, 16))
    return tm


def _compiler_params():
    return pltpu.CompilerParams(
        dimension_semantics=("parallel",),
        vmem_limit_bytes=_VMEM_LIMIT,
    )


# ---------------------------------------------------------------------------
# Kernels
# ---------------------------------------------------------------------------

def _matmul_leaky_kernel(x_ref, w_ref, o_ref):
    y = jnp.dot(x_ref[...], w_ref[...], preferred_element_type=jnp.float32)
    o_ref[...] = jnp.where(y > 0, y, _LEAKY_SLOPE * y)


def _matmul_stats_kernel(x_ref, w_ref, y_ref, s_ref, ss_ref):
    y = jnp.dot(x_ref[...], w_ref[...], preferred_element_type=jnp.float32)
    y_ref[...] = y
    s_ref[...] = jnp.sum(y, axis=0, keepdims=True)[None]        # (1,1,Coutp)
    ss_ref[...] = jnp.sum(y * y, axis=0, keepdims=True)[None]   # (1,1,Coutp)


def _scale_shift_leaky_kernel(y_ref, scale_ref, shift_ref, o_ref):
    y = y_ref[...] * scale_ref[...] + shift_ref[...]
    o_ref[...] = jnp.where(y > 0, y, _LEAKY_SLOPE * y)


# ---------------------------------------------------------------------------
# Layer wrappers
# ---------------------------------------------------------------------------

def _gemm_leaky(cols, w2d_bf16):
    """cols (M,K) f32  x  w2d (K,Coutp) bf16  ->  LeakyReLU(conv)  (M,Coutp) f32."""
    M, K = cols.shape
    coutp = w2d_bf16.shape[1]
    tm = _choose_tm(M, K, coutp)
    mpad = _round_up(M, tm)
    x = jnp.pad(cols, ((0, mpad - M), (0, 0))).astype(jnp.bfloat16)

    out = pl.pallas_call(
        _matmul_leaky_kernel,
        grid=(mpad // tm,),
        in_specs=[
            pl.BlockSpec((tm, K), lambda i: (i, 0)),
            pl.BlockSpec((K, coutp), lambda i: (0, 0)),
        ],
        out_specs=pl.BlockSpec((tm, coutp), lambda i: (i, 0)),
        out_shape=jax.ShapeDtypeStruct((mpad, coutp), jnp.float32),
        compiler_params=_compiler_params(),
    )(x, w2d_bf16)
    return out[:M]


def _gemm_bn_leaky(cols, w2d_bf16, gamma_p, beta_p):
    """Conv GEMM + train-mode BatchNorm (stats over all M rows) + LeakyReLU."""
    M, K = cols.shape
    coutp = w2d_bf16.shape[1]
    tm = _choose_tm(M, K, coutp)
    mpad = _round_up(M, tm)
    nt = mpad // tm
    x = jnp.pad(cols, ((0, mpad - M), (0, 0))).astype(jnp.bfloat16)

    # Pass 1: tiled matmul + per-tile partial sums (padded rows are exactly 0).
    y, psum, psumsq = pl.pallas_call(
        _matmul_stats_kernel,
        grid=(nt,),
        in_specs=[
            pl.BlockSpec((tm, K), lambda i: (i, 0)),
            pl.BlockSpec((K, coutp), lambda i: (0, 0)),
        ],
        out_specs=(
            pl.BlockSpec((tm, coutp), lambda i: (i, 0)),
            pl.BlockSpec((1, 1, coutp), lambda i: (i, 0, 0)),
            pl.BlockSpec((1, 1, coutp), lambda i: (i, 0, 0)),
        ),
        out_shape=(
            jax.ShapeDtypeStruct((mpad, coutp), jnp.float32),
            jax.ShapeDtypeStruct((nt, 1, coutp), jnp.float32),
            jax.ShapeDtypeStruct((nt, 1, coutp), jnp.float32),
        ),
        compiler_params=_compiler_params(),
    )(x, w2d_bf16)

    # Tiny cross-tile reduction; fold gamma/beta into per-channel scale/shift.
    total = jnp.sum(psum, axis=0)                 # (1, coutp)
    total_sq = jnp.sum(psumsq, axis=0)            # (1, coutp)
    mean = total / M                              # divide by TRUE row count
    var = total_sq / M - mean * mean              # biased var (PyTorch train-mode)
    scale = gamma_p[None, :] * jax.lax.rsqrt(var + _BN_EPS)
    shift = beta_p[None, :] - mean * scale

    # Pass 2: normalize + LeakyReLU, tiled / parallel.
    out = pl.pallas_call(
        _scale_shift_leaky_kernel,
        grid=(nt,),
        in_specs=[
            pl.BlockSpec((tm, coutp), lambda i: (i, 0)),
            pl.BlockSpec((1, coutp), lambda i: (0, 0)),
            pl.BlockSpec((1, coutp), lambda i: (0, 0)),
        ],
        out_specs=pl.BlockSpec((tm, coutp), lambda i: (i, 0)),
        out_shape=jax.ShapeDtypeStruct((mpad, coutp), jnp.float32),
        compiler_params=_compiler_params(),
    )(y, scale, shift)
    return out[:M]


# ---------------------------------------------------------------------------
# Model
# ---------------------------------------------------------------------------

class DiscriminatorPallas:
    """Pallas port of BasicGANs/DCGAN.py::Discriminator (is_wgan=False)."""

    def __init__(self, image_dim, hidden_dim, resolution=128, is_wgan=False, *, key):
        assert not is_wgan, "only the BatchNorm (non-WGAN) variant is implemented"
        n_layers = int(math.log2(resolution)) - 1
        keys = jax.random.split(key, n_layers)
        self.layers = []
        for i in range(n_layers):
            coeff_input = 2 ** (i - 1)
            coeff_output = 2 ** i
            stride, padding = 2, 1
            is_first = is_last = False
            if i == 0:
                is_first = True
                coeff_input = image_dim / hidden_dim
            elif i == n_layers - 1:
                stride, padding = 1, 0
                is_last = True
                coeff_output = 1 / hidden_dim
            in_dim = int(hidden_dim * coeff_input)
            out_dim = int(hidden_dim * coeff_output)

            # Deterministic synthetic weights (PyTorch shape [Cout, Cin, 4, 4]).
            w = 0.05 * jax.random.normal(keys[i], (out_dim, in_dim, 4, 4), jnp.float32)
            # GEMM layout (kh, kw, Cin, Cout) -> (K, Cout); K ordering matches
            # the NHWC patch ordering produced by _im2col_nhwc.
            w2d = w.transpose(2, 3, 1, 0).reshape(in_dim * 16, out_dim)

            if is_last:
                layer = dict(kind="sigmoid", w2d=w2d, stride=stride, pad=padding,
                             cout=out_dim)
            else:
                coutp = _round_up(out_dim, 128)   # lane-dense output columns
                w2d_p = jnp.pad(w2d, ((0, 0), (0, coutp - out_dim))).astype(jnp.bfloat16)
                if is_first:
                    layer = dict(kind="leaky", w2d=w2d_p, stride=stride, pad=padding,
                                 cout=out_dim, coutp=coutp)
                else:
                    # BN fresh-init params, padded (pad channels stay exactly 0).
                    gamma = jnp.ones((coutp,), jnp.float32)
                    beta = jnp.zeros((coutp,), jnp.float32)
                    layer = dict(kind="bn_leaky", w2d=w2d_p, stride=stride, pad=padding,
                                 cout=out_dim, coutp=coutp, gamma=gamma, beta=beta)
            self.layers.append(layer)

    def __call__(self, x_nchw):
        # Single NCHW -> NHWC conversion; all intermediates stay NHWC.
        x = jnp.transpose(x_nchw, (0, 2, 3, 1))
        for layer in self.layers:
            N = x.shape[0]
            cols, Ho, Wo = _im2col_nhwc(x, 4, layer["stride"], layer["pad"])
            # TODO(synk): replace HBM-materialized im2col with an implicit-GEMM
            # Pallas kernel (accumulate the 16 shifted-slice matmuls in VMEM) to
            # remove the 16x read amplification on the memory-bound layers.
            if layer["kind"] == "sigmoid":
                # Final conv: 1x1 spatial, Cout=1, M=N rows -> plain XLA (a
                # Pallas call here is pure launch/DMA overhead, fully-masked stores).
                y = jax.nn.sigmoid(jnp.dot(cols, layer["w2d"]))
                return y.reshape(N, 1, 1, 1)      # NCHW, matches PyTorch output
            if layer["kind"] == "leaky":
                y = _gemm_leaky(cols, layer["w2d"])
            else:
                y = _gemm_bn_leaky(cols, layer["w2d"], layer["gamma"], layer["beta"])
            x = y[:, :layer["cout"]].reshape(N, Ho, Wo, layer["cout"])
        return x


if __name__ == "__main__":
    key = jax.random.PRNGKey(0)
    k_x, k_p = jax.random.split(key)

    # Small config: resolution=16 -> 3 layers (LeakyReLU, BN+LeakyReLU, Sigmoid);
    # input x is NCHW [2, 4, 16, 16].
    image_dim, hidden_dim, resolution = 4, 32, 16
    x = jax.random.normal(k_x, (2, image_dim, resolution, resolution), jnp.float32)

    disc = DiscriminatorPallas(image_dim, hidden_dim, resolution=resolution, key=k_p)
    out = jax.block_until_ready(disc(x))

    assert out.shape == (2, 1, 1, 1), out.shape
    assert bool(jnp.all((out >= 0.0) & (out <= 1.0)))  # sigmoid output range
    print("KERNEL_OK")
</pallas_src>

<mosaic_0001>
module attributes {stable_mosaic.version = 11 : i64} {
  func.func @_matmul_leaky_kernel(%arg0: i32, %arg1: memref<128x64xbf16, #tpu.memory_space<vmem>>, %arg2: memref<64x128xbf16, #tpu.memory_space<vmem>>, %arg3: memref<128x128xf32, #tpu.memory_space<vmem>>) attributes {dimension_semantics = [#tpu.dimension_semantics<parallel>], iteration_bounds = array<i64: 1>, scalar_prefetch = 0 : i64, scratch_operands = 0 : i64, tpu.core_type = #tpu.core_type<tc>, window_params = [{transform_indices = @transform_0, window_bounds = array<i64: 128, 64>}, {pipeline_mode = #tpu.pipeline_mode<synchronous>, transform_indices = @transform_1, window_bounds = array<i64: 64, 128>}, {transform_indices = @transform_2, window_bounds = array<i64: 128, 128>}]} {
    %c0 = arith.constant 0 : index
    %c0_0 = arith.constant 0 : index
    %0 = vector.load %arg1[%c0, %c0_0] : memref<128x64xbf16, #tpu.memory_space<vmem>>, vector<128x64xbf16>
    %c0_1 = arith.constant 0 : index
    %c0_2 = arith.constant 0 : index
    %1 = vector.load %arg2[%c0_1, %c0_2] : memref<64x128xbf16, #tpu.memory_space<vmem>>, vector<64x128xbf16>
    %cst = arith.constant dense<0.000000e+00> : vector<128x128xf32>
    %2 = tpu.matmul %0, %1, %cst {dimension_numbers = #tpu.dot_dimension_numbers<[1], [0], [0], [1], [0, 0, 1, 1], [], []>} : vector<128x64xbf16>, vector<64x128xbf16>, vector<128x128xf32> -> vector<128x128xf32>
    %cst_3 = arith.constant 0.000000e+00 : f32
    %3 = vector.broadcast %cst_3 : f32 to vector<128x128xf32>
    %4 = arith.cmpf ogt, %2, %3 : vector<128x128xf32>
    %cst_4 = arith.constant 2.000000e-01 : f32
    %5 = vector.broadcast %cst_4 : f32 to vector<128x128xf32>
    %6 = arith.mulf %5, %2 : vector<128x128xf32>
    %7 = arith.select %4, %2, %6 : vector<128x128xi1>, vector<128x128xf32>
    %c0_5 = arith.constant 0 : index
    %c0_6 = arith.constant 0 : index
    %8 = vector.load %arg3[%c0_5, %c0_6] : memref<128x128xf32, #tpu.memory_space<vmem>>, vector<128x128xf32>
    tpu.vector_store %arg3[%c0_5, %c0_6], %7 {strides = array<i32>} : memref<128x128xf32, #tpu.memory_space<vmem>>, vector<128x128xf32>,
    return
  }
  func.func @transform_0(%arg0: i32) -> (i32, i32) {
    %c0_i32 = arith.constant 0 : i32
    %c0_i32_0 = arith.constant 0 : i32
    return %arg0, %c0_i32 : i32, i32
  }
  func.func @transform_1(%arg0: i32) -> (i32, i32) {
    %c0_i32 = arith.constant 0 : i32
    %c0_i32_0 = arith.constant 0 : i32
    %c0_i32_1 = arith.constant 0 : i32
    return %c0_i32, %c0_i32_0 : i32, i32
  }
  func.func @transform_2(%arg0: i32) -> (i32, i32) {
    %c0_i32 = arith.constant 0 : i32
    %c0_i32_0 = arith.constant 0 : i32
    return %arg0, %c0_i32 : i32, i32
  }
}

</mosaic_0001>

<llo_original>
// kernel: tpu_custom_call.1
$region0: #{tpu_custom_call.1}
  #allocation0 [shape = 'u32[]', space=smem, size = 0x4, offset = 0x4, fixed_abs, tag = 'smem constant byte address 0x4 - core index']
  #allocation1 [shape = 'u32[144,128]{1,0:T(1,128)}', space=vmem, size = 0x12000, scoped, tag = 'internal scratch']
  %s0 = inlined_call_operand.vmem [shape: bf16[128,64], index: 0, kind: input, shape index: {}]
  %s1 = inlined_call_operand.vmem [shape: bf16[64,128], index: 1, kind: input, shape index: {}]
  %s2 = inlined_call_operand.hbm [shape: f32[128,128], index: 2, kind: output, shape index: {}]
  %s3 = sld [smem:[#allocation0]]
  $region18: #{tpu_custom_call.1} parent=0
    _
  %s5 = ssub.s32 1, %s3
  %s6 = scalar_select 0, %s5, %s3
  $region1: #{tpu_custom_call.1} parent=0
    #allocation2 [shape = 'u8[65536]{0}', space=vmem, size = 0x10000, scoped, tag = 'output window, operand 0, single buffered']
    #allocation3 [shape = 's32[1]{0}', space=sflag, size = 0x4, scoped, tag = 'scoped memory for tpu_custom_call.1']
    %7 = vsyncpa [#allocation3], 0
    // Predicated region
    $region2: #{tpu_custom_call.1} parent=1 // pred_check
      _
    $region3: #{tpu_custom_call.1} parent=1 // pred_check_branch
      %9 = sbr.rel (0) target = $region5
    $region4: #{tpu_custom_call.1} parent=1 // pred_region
      _
    $region5: #{tpu_custom_call.1} parent=1 // pred_fallthru
      _
    // Predicated region
    $region6: #{tpu_custom_call.1} parent=1 // pred_check
      _
    $region7: #{tpu_custom_call.1} parent=1 // pred_check_branch
      %11 = sbr.rel (0) target = $region9
    $region8: #{tpu_custom_call.1} parent=1 // pred_region
      _
    $region9: #{tpu_custom_call.1} parent=1 // pred_fallthru
      _
    %v13 = vld [vmem:[%s0] sm:$0xf]
    %v14 = vld [vmem:[%s0 + $0x4] sm:$0xf]
    %v15 = vld [vmem:[%s0 + $0x8] sm:$0xf]
    %v16 = vld [vmem:[%s0 + $0xc] sm:$0xf]
    %v17 = vld [vmem:[%s0 + $0x10] sm:$0xf]
    %v18 = vld [vmem:[%s0 + $0x14] sm:$0xf]
    %v19 = vld [vmem:[%s0 + $0x18] sm:$0xf]
    %v20 = vld [vmem:[%s0 + $0x1c] sm:$0xf]
    %v21 = vld [vmem:[%s0 + $0x20] sm:$0xf]
    %v22 = vld [vmem:[%s0 + $0x24] sm:$0xf]
    %v23 = vld [vmem:[%s0 + $0x28] sm:$0xf]
    %v24 = vld [vmem:[%s0 + $0x2c] sm:$0xf]
    %v25 = vld [vmem:[%s0 + $0x30] sm:$0xf]
    %v26 = vld [vmem:[%s0 + $0x34] sm:$0xf]
    %v27 = vld [vmem:[%s0 + $0x38] sm:$0xf]
    %v28 = vld [vmem:[%s0 + $0x3c] sm:$0xf]
    %v29 = vld [vmem:[%s1] sm:$0xf]
    %v30 = vld [vmem:[%s1 + $0x4] sm:$0xf]
    %v31 = vld [vmem:[%s1 + $0x8] sm:$0xf]
    %v32 = vld [vmem:[%s1 + $0xc] sm:$0xf]
    %v33 = vld [vmem:[%s1 + $0x10] sm:$0xf]
    %v34 = vld [vmem:[%s1 + $0x14] sm:$0xf]
    %v35 = vld [vmem:[%s1 + $0x18] sm:$0xf]
    %v36 = vld [vmem:[%s1 + $0x1c] sm:$0xf]
    %v53 = vunpack.c.l.b16 %v13
    %v54 = vunpack.c.l.b16 %v14
    %v55 = vunpack.c.l.b16 %v15
    %v56 = vunpack.c.l.b16 %v16
    %v57 = vunpack.c.l.b16 %v17
    %v58 = vunpack.c.l.b16 %v18
    %v59 = vunpack.c.l.b16 %v19
    %v60 = vunpack.c.l.b16 %v20
    %v61 = vunpack.c.l.b16 %v21
    %v62 = vunpack.c.l.b16 %v22
    %v63 = vunpack.c.l.b16 %v23
    %v64 = vunpack.c.l.b16 %v24
    %v65 = vunpack.c.l.b16 %v25
    %v66 = vunpack.c.l.b16 %v26
    %v67 = vunpack.c.l.b16 %v27
    %v68 = vunpack.c.l.b16 %v28
    %v69 = vpack.c.b16 %v54, %v53
    %v70 = vpack.c.b16 %v56, %v55
    %v71 = vpack.c.b16 %v58, %v57
    %v72 = vpack.c.b16 %v60, %v59
    %v73 = vpack.c.b16 %v62, %v61
    %v74 = vpack.c.b16 %v64, %v63
    %v75 = vpack.c.b16 %v66, %v65
    %v76 = vpack.c.b16 %v68, %v67
    %v85 = vunpack.c.l.b16 %v29
    %v86 = vunpack.c.l.b16 %v30
    %v87 = vunpack.c.l.b16 %v31
    %v88 = vunpack.c.l.b16 %v32
    %v89 = vunpack.c.l.b16 %v33
    %v90 = vunpack.c.l.b16 %v34
    %v91 = vunpack.c.l.b16 %v35
    %v92 = vunpack.c.l.b16 %v36
    %v93 = vpack.c.b16 %v86, %v85
    %v94 = vpack.c.b16 %v88, %v87
    %v95 = vpack.c.b16 %v90, %v89
    %v96 = vpack.c.b16 %v92, %v91
    %vm101 = vcmask 523264
    %v103 = vsel %vm101, %v69, 0
    %v106 = vsel %vm101, %v70, 0
    %v109 = vsel %vm101, %v71, 0
    %v112 = vsel %vm101, %v72, 0
    %v115 = vsel %vm101, %v73, 0
    %v118 = vsel %vm101, %v74, 0
    %v121 = vsel %vm101, %v75, 0
    %v124 = vsel %vm101, %v76, 0
    %126 = vmatprep.subr.bf16.mxu0 0
    %127 = vmatpush1.bf16.msra.mxu0 %v93
    %128 = vmatprep.subr.bf16.mxu0 0
    %129 = vmatpush1.bf16.msra.mxu0 %v94
    %130 = vmatprep.subr.bf16.mxu0 0
    %131 = vmatpush1.bf16.msra.mxu0 %v95
    %132 = vmatprep.subr.bf16.mxu0 0
    %133 = vmatpush1.bf16.msra.mxu0 %v96
    %134 = vmatprep.subr.bf16.mxu0 0
    %135 = vmatpush1.bf16.msra.mxu0 0
    %136 = vmatprep.subr.bf16.mxu0 0
    %137 = vmatpush1.bf16.msra.mxu0 0
    %138 = vmatprep.subr.bf16.mxu0 0
    %139 = vmatpush1.bf16.msra.mxu0 0
    %140 = vmatprep.subr.bf16.mxu0 0
    %141 = vmatpush1.bf16.msra.mxu0 0
    %142 = vmatprep.subr.bf16.mxu0 0
    %143 = vmatpush1.bf16.msra.mxu0 0
    %144 = vmatprep.subr.bf16.mxu0 0
    %145 = vmatpush1.bf16.msra.mxu0 0
    %146 = vmatprep.subr.bf16.mxu0 0
    %147 = vmatpush1.bf16.msra.mxu0 0
    %148 = vmatprep.subr.bf16.mxu0 0
    %149 = vmatpush1.bf16.msra.mxu0 0
    %150 = vmatprep.subr.bf16.mxu0 0
    %151 = vmatpush1.bf16.msra.mxu0 0
    %152 = vmatprep.subr.bf16.mxu0 0
    %153 = vmatpush1.bf16.msra.mxu0 0
    %154 = vmatprep.subr.bf16.mxu0 0
    %155 = vmatpush1.bf16.msra.mxu0 0
    %156 = vmatprep.subr.bf16.mxu0 0
    %157 = vmatpush1.bf16.msra.mxu0 0
    %158 = vmatprep.mubr.bf16.mxu0 0
    %159 = vmatmul.mubr.bf16.gmra.mrb[0].mxu0 %v103
    %v160 = vpop.f32.mrb[0].mxu0
    %v161 = vadd.f32 0.0, %v160
    %v162 = vpop.f32.mrb[0].mxu0
    %v163 = vpop.f32.mrb[0].mxu0
    %v164 = vadd.f32 0.0, %v163
    %v165 = vpop.f32.mrb[0].mxu0
    %166 = vmatprep.mubr.bf16.mxu0 0
    %167 = vmatmul.mubr.bf16.gmra.mrb[0].mxu0 %v106
    %v168 = vpop.f32.mrb[0].mxu0
    %v169 = vadd.f32 0.0, %v168
    %v170 = vpop.f32.mrb[0].mxu0
    %v171 = vpop.f32.mrb[0].mxu0
    %v172 = vadd.f32 0.0, %v171
    %v173 = vpop.f32.mrb[0].mxu0
    %174 = vmatprep.mubr.bf16.mxu0 0
    %175 = vmatmul.mubr.bf16.gmra.mrb[0].mxu0 %v109
    %v176 = vpop.f32.mrb[0].mxu0
    %v177 = vadd.f32 0.0, %v176
    %v178 = vpop.f32.mrb[0].mxu0
    %v179 = vpop.f32.mrb[0].mxu0
    %v180 = vadd.f32 0.0, %v179
    %v181 = vpop.f32.mrb[0].mxu0
    %182 = vmatprep.mubr.bf16.mxu0 0
    %183 = vmatmul.mubr.bf16.gmra.mrb[0].mxu0 %v112
    %v184 = vpop.f32.mrb[0].mxu0
    %v185 = vadd.f32 0.0, %v184
    %v186 = vpop.f32.mrb[0].mxu0
    %v187 = vpop.f32.mrb[0].mxu0
    %v188 = vadd.f32 0.0, %v187
    %v189 = vpop.f32.mrb[0].mxu0
    %190 = vmatprep.mubr.bf16.mxu0 0
    %191 = vmatmul.mubr.bf16.gmra.mrb[0].mxu0 %v115
    %v192 = vpop.f32.mrb[0].mxu0
    %v193 = vadd.f32 0.0, %v192
    %v194 = vpop.f32.mrb[0].mxu0
    %v195 = vpop.f32.mrb[0].mxu0
    %v196 = vadd.f32 0.0, %v195
    %v197 = vpop.f32.mrb[0].mxu0
    %198 = vmatprep.mubr.bf16.mxu0 0
    %199 = vmatmul.mubr.bf16.gmra.mrb[0].mxu0 %v118
    %v200 = vpop.f32.mrb[0].mxu0
    %v201 = vadd.f32 0.0, %v200
    %v202 = vpop.f32.mrb[0].mxu0
    %v203 = vpop.f32.mrb[0].mxu0
    %v204 = vadd.f32 0.0, %v203
    %v205 = vpop.f32.mrb[0].mxu0
    %206 = vmatprep.mubr.bf16.mxu0 0
    %207 = vmatmul.mubr.bf16.gmra.mrb[0].mxu0 %v121
    %v208 = vpop.f32.mrb[0].mxu0
    %v209 = vadd.f32 0.0, %v208
    %v210 = vpop.f32.mrb[0].mxu0
    %v211 = vpop.f32.mrb[0].mxu0
    %v212 = vadd.f32 0.0, %v211
    %v213 = vpop.f32.mrb[0].mxu0
    %214 = vmatprep.mubr.bf16.mxu0 0
    %215 = vmatmul.mubr.bf16.gmra.mrb[0].mxu0 %v124
    %v216 = vpop.f32.mrb[0].mxu0
    %v217 = vadd.f32 0.0, %v216
    %v218 = vpop.f32.mrb[0].mxu0
    %v219 = vpop.f32.mrb[0].mxu0
    %v220 = vadd.f32 0.0, %v219
    %v221 = vpop.f32.mrb[0].mxu0
    %222 = vdwg.mxu0
    %vm223 = vcmp.gt.f32.partialorder %v161, 0.0
    %vm224 = vcmp.gt.f32.partialorder %v164, 0.0
    %vm225 = vcmp.gt.f32.partialorder %v169, 0.0
    %vm226 = vcmp.gt.f32.partialorder %v172, 0.0
    %vm227 = vcmp.gt.f32.partialorder %v177, 0.0
    %vm228 = vcmp.gt.f32.partialorder %v180, 0.0
    %vm229 = vcmp.gt.f32.partialorder %v185, 0.0
    %vm230 = vcmp.gt.f32.partialorder %v188, 0.0
    %vm231 = vcmp.gt.f32.partialorder %v193, 0.0
    %vm232 = vcmp.gt.f32.partialorder %v196, 0.0
    %vm233 = vcmp.gt.f32.partialorder %v201, 0.0
    %vm234 = vcmp.gt.f32.partialorder %v204, 0.0
    %vm235 = vcmp.gt.f32.partialorder %v209, 0.0
    %vm236 = vcmp.gt.f32.partialorder %v212, 0.0
    %vm237 = vcmp.gt.f32.partialorder %v217, 0.0
    %vm238 = vcmp.gt.f32.partialorder %v220, 0.0
    %v239 = vmul.f32 %v161, 0.2
    %v240 = vmul.f32 %v164, 0.2
    %v241 = vmul.f32 %v169, 0.2
    %v242 = vmul.f32 %v172, 0.2
    %v243 = vmul.f32 %v177, 0.2
    %v244 = vmul.f32 %v180, 0.2
    %v245 = vmul.f32 %v185, 0.2
    %v246 = vmul.f32 %v188, 0.2
    %v247 = vmul.f32 %v193, 0.2
    %v248 = vmul.f32 %v196, 0.2
    %v249 = vmul.f32 %v201, 0.2
    %v250 = vmul.f32 %v204, 0.2
    %v251 = vmul.f32 %v209, 0.2
    %v252 = vmul.f32 %v212, 0.2
    %v253 = vmul.f32 %v217, 0.2
    %v254 = vmul.f32 %v220, 0.2
    %v255 = vsel %vm223, %v161, %v239
    %v256 = vsel %vm224, %v164, %v240
    %v257 = vsel %vm225, %v169, %v241
    %v258 = vsel %vm226, %v172, %v242
    %v259 = vsel %vm227, %v177, %v243
    %v260 = vsel %vm228, %v180, %v244
    %v261 = vsel %vm229, %v185, %v245
    %v262 = vsel %vm230, %v188, %v246
    %v263 = vsel %vm231, %v193, %v247
    %v264 = vsel %vm232, %v196, %v248
    %v265 = vsel %vm233, %v201, %v249
    %v266 = vsel %vm234, %v204, %v250
    %v267 = vsel %vm235, %v209, %v251
    %v268 = vsel %vm236, %v212, %v252
    %v269 = vsel %vm237, %v217, %v253
    %v270 = vsel %vm238, %v220, %v254
    %271 = vst [vmem:[#allocation2] sm:$0xff] %v255
    %272 = vst [vmem:[#allocation2 + $0x8] sm:$0xff] %v256
    %273 = vst [vmem:[#allocation2 + $0x10] sm:$0xff] %v257
    %274 = vst [vmem:[#allocation2 + $0x18] sm:$0xff] %v258
    %275 = vst [vmem:[#allocation2 + $0x20] sm:$0xff] %v259
    %276 = vst [vmem:[#allocation2 + $0x28] sm:$0xff] %v260
    %277 = vst [vmem:[#allocation2 + $0x30] sm:$0xff] %v261
    %278 = vst [vmem:[#allocation2 + $0x38] sm:$0xff] %v262
    %279 = vst [vmem:[#allocation2 + $0x40] sm:$0xff] %v263
    %280 = vst [vmem:[#allocation2 + $0x48] sm:$0xff] %v264
    %281 = vst [vmem:[#allocation2 + $0x50] sm:$0xff] %v265
    %282 = vst [vmem:[#allocation2 + $0x58] sm:$0xff] %v266
    %283 = vst [vmem:[#allocation2 + $0x60] sm:$0xff] %v267
    %284 = vst [vmem:[#allocation2 + $0x68] sm:$0xff] %v268
    %285 = vst [vmem:[#allocation2 + $0x70] sm:$0xff] %v269
    %286 = vst [vmem:[#allocation2 + $0x78] sm:$0xff] %v270
    // Predicated region
    $region10: #{tpu_custom_call.1} parent=1 // pred_check
      _
    $region11: #{tpu_custom_call.1} parent=1 // pred_check_branch
      %288 = sbr.rel (0) target = $region13
    $region12: #{tpu_custom_call.1} parent=1 // pred_region
      %s290 = ssub.s32 2048, 2048
      %291 = vsyncadd [#allocation3], %s290
      %s292 = sshll.u32 [#allocation2], 4
      %s293 = int_to_ptr.vmem [resolvable:$true] %s292
      %298 = dma.vmem_to_hbm [thread:$0]  %s293, 2048, %s2, [#allocation3], 128, 128, 8
    $region13: #{tpu_custom_call.1} parent=1 // pred_fallthru
      _
    // Predicated region
    $region14: #{tpu_custom_call.1} parent=1 // pred_check
      _
    $region15: #{tpu_custom_call.1} parent=1 // pred_check_branch
      %300 = sbr.rel (0) target = $region17
    $region16: #{tpu_custom_call.1} parent=1 // pred_region
      %301 = dma.done [#allocation3], 2048
    $region17: #{tpu_custom_call.1} parent=1 // pred_fallthru
      _
    %302 = vsyncpa [#allocation3], 1

</llo_original>
